<compile_context>
chip_gen: v6e
topology: v6e:2x2x1
jax: 0.10.0
libtpu: 0.0.40
codegen_flags: <defaults>
</compile_context>

<pallas_src>
import functools

import jax
import jax.numpy as jnp
from jax.experimental import pallas as pl
from jax.experimental.pallas import tpu as pltpu


def _round_up(a, b):
    return (a + b - 1) // b * b


def _batchnorm_adj_kernel(x_ref, gamma_ref, beta_ref, o_ref, *, eps, inv_b):
    # x_ref: (B_pad, TC) block -- full (padded) batch, a tile of features.
    x = x_ref[...].astype(jnp.float32)

    # Single reduction pass: sum and sum-of-squares over the batch (sublane) axis.
    # Padded batch rows are zero, so dividing by the true batch size (inv_b)
    # gives exact mean / biased variance.
    s = jnp.sum(x, axis=0, keepdims=True)            # (1, TC)
    ss = jnp.sum(x * x, axis=0, keepdims=True)       # (1, TC)
    mean = s * inv_b
    var = jnp.maximum(ss * inv_b - mean * mean, 0.0)  # clamp fp cancellation
    inv_std = jax.lax.rsqrt(var + eps)

    # Fused affine: y = (x - mean) * inv_std * gamma + beta = x * scale + shift
    scale = inv_std * gamma_ref[...]
    shift = beta_ref[...] - mean * scale
    o_ref[...] = (x * scale + shift).astype(o_ref.dtype)


def _select_tile_c(b_pad, c, in_bytes, vmem_cap):
    """Largest multiple-of-128 feature tile that fits the VMEM budget."""
    budget = vmem_cap // 2  # leave headroom for compiler temporaries / regalloc
    # Per feature column: x input (2 bufs) + output (2 bufs) in the I/O dtype,
    # plus ~2 full-block f32 temporaries inside the kernel body.
    per_col = b_pad * (4 * in_bytes + 2 * 4)
    tc = (budget // per_col) // 128 * 128
    tc = max(128, min(tc, 16384))            # keep grid long-ish, bursts large
    tc = min(tc, _round_up(c, 128))
    return int(tc)


def batchnorm_adj_forward(x, gamma, beta, *, eps=1e-5):
    """x: (B, R, F); gamma/beta: (R*F,). Returns (B, R, F)."""
    B, R, F = x.shape
    C = R * F

    try:
        vmem_cap = int(pltpu.get_tpu_info().vmem_capacity_bytes)
    except Exception:
        vmem_cap = 64 * 1024 * 1024  # conservative (v7x per-TC) fallback

    in_bytes = jnp.dtype(x.dtype).itemsize
    B_pad = _round_up(B, 8)
    tc = _select_tile_c(B_pad, C, in_bytes, vmem_cap)
    C_pad = _round_up(C, tc)
    grid = (C_pad // tc,)

    # Do NOT upcast x in the wrapper: keep the HBM<->VMEM DMA at the I/O width.
    x2d = x.reshape(B, C)
    if B_pad != B or C_pad != C:
        x2d = jnp.pad(x2d, ((0, B_pad - B), (0, C_pad - C)))
    gamma2d = jnp.pad(gamma.astype(jnp.float32), (0, C_pad - C)).reshape(1, C_pad)
    beta2d = jnp.pad(beta.astype(jnp.float32), (0, C_pad - C)).reshape(1, C_pad)

    kernel = functools.partial(_batchnorm_adj_kernel, eps=eps, inv_b=1.0 / float(B))

    out2d = pl.pallas_call(
        kernel,
        out_shape=jax.ShapeDtypeStruct((B_pad, C_pad), x.dtype),
        grid_spec=pltpu.PrefetchScalarGridSpec(
            num_scalar_prefetch=0,
            grid=grid,
            in_specs=[
                pl.BlockSpec((B_pad, tc), lambda j: (0, j)),
                pl.BlockSpec((1, tc), lambda j: (0, j)),
                pl.BlockSpec((1, tc), lambda j: (0, j)),
            ],
            out_specs=pl.BlockSpec((B_pad, tc), lambda j: (0, j)),
        ),
        compiler_params=pltpu.CompilerParams(
            dimension_semantics=("parallel",),
            vmem_limit_bytes=vmem_cap,
        ),
    )(x2d, gamma2d, beta2d)

    return out2d[:B, :C].reshape(B, R, F)


def _reference(x, gamma, beta, eps=1e-5):
    B, R, F = x.shape
    x2d = x.reshape(B, R * F).astype(jnp.float32)
    mean = jnp.mean(x2d, axis=0, keepdims=True)
    var = jnp.mean((x2d - mean) ** 2, axis=0, keepdims=True)
    y = (x2d - mean) / jnp.sqrt(var + eps) * gamma[None, :] + beta[None, :]
    return y.reshape(B, R, F).astype(x.dtype)


if __name__ == "__main__":
    key = jax.random.PRNGKey(0)
    k_x, k_g, k_b, k_x2, k_g2, k_b2 = jax.random.split(key, 6)

    # Test 1: small, "nice" shape (num_features = R*F = 64); exercises B padding.
    B, R, F = 4, 4, 16
    x = jax.random.normal(k_x, (B, R, F), dtype=jnp.float32)
    gamma = jnp.ones((R * F,), jnp.float32) + 0.1 * jax.random.normal(k_g, (R * F,))
    beta = 0.1 * jax.random.normal(k_b, (R * F,))

    out = batchnorm_adj_forward(x, gamma, beta)
    out = jax.block_until_ready(out)
    ref = _reference(x, gamma, beta)
    assert out.shape == (B, R, F)
    assert jnp.max(jnp.abs(out - ref)) < 1e-4, "mismatch vs reference (test 1)"

    # Test 2: ragged shape (C = 300, not a multiple of 128; B = 5, not a
    # multiple of 8) -- exercises both feature- and batch-padding paths.
    B2, R2, F2 = 5, 3, 100
    x2 = jax.random.normal(k_x2, (B2, R2, F2), dtype=jnp.float32)
    gamma2 = jnp.ones((R2 * F2,), jnp.float32) + 0.1 * jax.random.normal(k_g2, (R2 * F2,))
    beta2 = 0.1 * jax.random.normal(k_b2, (R2 * F2,))

    out2 = batchnorm_adj_forward(x2, gamma2, beta2)
    out2 = jax.block_until_ready(out2)
    ref2 = _reference(x2, gamma2, beta2)
    assert out2.shape == (B2, R2, F2)
    assert jnp.max(jnp.abs(out2 - ref2)) < 1e-4, "mismatch vs reference (test 2)"

    print("KERNEL_OK")
</pallas_src>

<mosaic_0001>
module attributes {stable_mosaic.version = 11 : i64} {
  func.func @_batchnorm_adj_kernel(%arg0: i32, %arg1: memref<8x128xf32, #tpu.memory_space<vmem>>, %arg2: memref<1x128xf32, #tpu.memory_space<vmem>>, %arg3: memref<1x128xf32, #tpu.memory_space<vmem>>, %arg4: memref<8x128xf32, #tpu.memory_space<vmem>>) attributes {dimension_semantics = [#tpu.dimension_semantics<parallel>], iteration_bounds = array<i64: 1>, scalar_prefetch = 0 : i64, scratch_operands = 0 : i64, tpu.core_type = #tpu.core_type<tc>, window_params = [{transform_indices = @transform_0, window_bounds = array<i64: 8, 128>}, {transform_indices = @transform_1, window_bounds = array<i64: 1, 128>}, {transform_indices = @transform_2, window_bounds = array<i64: 1, 128>}, {transform_indices = @transform_3, window_bounds = array<i64: 8, 128>}]} {
    %c0 = arith.constant 0 : index
    %c0_0 = arith.constant 0 : index
    %0 = vector.load %arg1[%c0, %c0_0] : memref<8x128xf32, #tpu.memory_space<vmem>>, vector<8x128xf32>
    %cst = arith.constant dense<0.000000e+00> : vector<128xf32>
    %1 = vector.multi_reduction <add>, %0, %cst [0] : vector<8x128xf32> to vector<128xf32>
    %2 = vector.shape_cast %1 : vector<128xf32> to vector<1x128xf32>
    %3 = arith.mulf %0, %0 : vector<8x128xf32>
    %cst_1 = arith.constant dense<0.000000e+00> : vector<128xf32>
    %4 = vector.multi_reduction <add>, %3, %cst_1 [0] : vector<8x128xf32> to vector<128xf32>
    %5 = vector.shape_cast %4 : vector<128xf32> to vector<1x128xf32>
    %cst_2 = arith.constant 2.500000e-01 : f32
    %6 = vector.broadcast %cst_2 : f32 to vector<1x128xf32>
    %7 = arith.mulf %2, %6 : vector<1x128xf32>
    %cst_3 = arith.constant 2.500000e-01 : f32
    %8 = vector.broadcast %cst_3 : f32 to vector<1x128xf32>
    %9 = arith.mulf %5, %8 : vector<1x128xf32>
    %10 = arith.mulf %7, %7 : vector<1x128xf32>
    %11 = arith.subf %9, %10 : vector<1x128xf32>
    %cst_4 = arith.constant 0.000000e+00 : f32
    %12 = vector.broadcast %cst_4 : f32 to vector<1x128xf32>
    %13 = arith.maximumf %11, %12 : vector<1x128xf32>
    %cst_5 = arith.constant 9.99999974E-6 : f32
    %14 = vector.broadcast %cst_5 : f32 to vector<1x128xf32>
    %15 = arith.addf %13, %14 : vector<1x128xf32>
    %16 = math.rsqrt %15 : vector<1x128xf32>
    %c0_6 = arith.constant 0 : index
    %c0_7 = arith.constant 0 : index
    %17 = vector.load %arg2[%c0_6, %c0_7] : memref<1x128xf32, #tpu.memory_space<vmem>>, vector<1x128xf32>
    %18 = arith.mulf %16, %17 : vector<1x128xf32>
    %c0_8 = arith.constant 0 : index
    %c0_9 = arith.constant 0 : index
    %19 = vector.load %arg3[%c0_8, %c0_9] : memref<1x128xf32, #tpu.memory_space<vmem>>, vector<1x128xf32>
    %20 = arith.mulf %7, %18 : vector<1x128xf32>
    %21 = arith.subf %19, %20 : vector<1x128xf32>
    %22 = vector.broadcast %18 : vector<1x128xf32> to vector<8x128xf32>
    %23 = arith.mulf %0, %22 : vector<8x128xf32>
    %24 = vector.broadcast %21 : vector<1x128xf32> to vector<8x128xf32>
    %25 = arith.addf %23, %24 : vector<8x128xf32>
    %c0_10 = arith.constant 0 : index
    %c0_11 = arith.constant 0 : index
    %26 = vector.load %arg4[%c0_10, %c0_11] : memref<8x128xf32, #tpu.memory_space<vmem>>, vector<8x128xf32>
    tpu.vector_store %arg4[%c0_10, %c0_11], %25 {strides = array<i32>} : memref<8x128xf32, #tpu.memory_space<vmem>>, vector<8x128xf32>,
    return
  }
  func.func @transform_0(%arg0: i32) -> (i32, i32) {
    %c0_i32 = arith.constant 0 : i32
    %c0_i32_0 = arith.constant 0 : i32
    return %c0_i32, %arg0 : i32, i32
  }
  func.func @transform_1(%arg0: i32) -> (i32, i32) {
    %c0_i32 = arith.constant 0 : i32
    %c0_i32_0 = arith.constant 0 : i32
    return %c0_i32, %arg0 : i32, i32
  }
  func.func @transform_2(%arg0: i32) -> (i32, i32) {
    %c0_i32 = arith.constant 0 : i32
    %c0_i32_0 = arith.constant 0 : i32
    return %c0_i32, %arg0 : i32, i32
  }
  func.func @transform_3(%arg0: i32) -> (i32, i32) {
    %c0_i32 = arith.constant 0 : i32
    %c0_i32_0 = arith.constant 0 : i32
    return %c0_i32, %arg0 : i32, i32
  }
}

</mosaic_0001>

<llo_original>
// kernel: tpu_custom_call.1
$region0: #{tpu_custom_call.1}
  #allocation0 [shape = 'u32[]', space=smem, size = 0x4, offset = 0x4, fixed_abs, tag = 'smem constant byte address 0x4 - core index']
  #allocation1 [shape = 'u32[144,128]{1,0:T(1,128)}', space=vmem, size = 0x12000, scoped, tag = 'internal scratch']
  %s0 = inlined_call_operand.hbm [shape: f32[8,128], index: 0, kind: input, shape index: {}]
  %s1 = inlined_call_operand.vmem [shape: f32[1,128], index: 1, kind: input, shape index: {}]
  %s2 = inlined_call_operand.vmem [shape: f32[1,128], index: 2, kind: input, shape index: {}]
  %s3 = inlined_call_operand.hbm [shape: f32[8,128], index: 3, kind: output, shape index: {}]
  %s4 = sld [smem:[#allocation0]]
  $region26: #{tpu_custom_call.1} parent=0
    _
  %s6 = ssub.s32 1, %s4
  %s7 = scalar_select 0, %s6, %s4
  $region1: #{tpu_custom_call.1} parent=0
    #allocation2 [shape = 'u8[4096]{0}', space=vmem, size = 0x1000, scoped, tag = 'input window, operand 0, single buffered']
    #allocation3 [shape = 's32[1]{0}', space=sflag, size = 0x4, scoped, tag = 'scoped memory for tpu_custom_call.1']
    #allocation4 [shape = 's32[1]{0}', space=sflag, size = 0x4, scoped, tag = 'scoped memory for tpu_custom_call.1']
    #allocation5 [shape = 'u8[4096]{0}', space=vmem, size = 0x1000, scoped, tag = 'output window, operand 0, single buffered']
    %8 = vsyncpa [#allocation3], 0
    %9 = vsyncpa [#allocation4], 0
    // Predicated region
    $region2: #{tpu_custom_call.1} parent=1 // pred_check
      _
    $region3: #{tpu_custom_call.1} parent=1 // pred_check_branch
      %11 = sbr.rel (0) target = $region5
    $region4: #{tpu_custom_call.1} parent=1 // pred_region
      %s13 = ssub.s32 128, 128
      %14 = vsyncadd [#allocation3], %s13
      %s16 = sshll.u32 [#allocation2], 4
      %s17 = int_to_ptr.vmem [resolvable:$true] %s16
      %19 = dma.hbm_to_vmem [thread:$0]  %s0, 128, %s17, [#allocation3]
    $region5: #{tpu_custom_call.1} parent=1 // pred_fallthru
      _
    // Predicated region
    $region6: #{tpu_custom_call.1} parent=1 // pred_check
      _
    $region7: #{tpu_custom_call.1} parent=1 // pred_check_branch
      %21 = sbr.rel (0) target = $region9
    $region8: #{tpu_custom_call.1} parent=1 // pred_region
      _
    $region9: #{tpu_custom_call.1} parent=1 // pred_fallthru
      _
    // Predicated region
    $region10: #{tpu_custom_call.1} parent=1 // pred_check
      _
    $region11: #{tpu_custom_call.1} parent=1 // pred_check_branch
      %23 = sbr.rel (0) target = $region13
    $region12: #{tpu_custom_call.1} parent=1 // pred_region
      _
    $region13: #{tpu_custom_call.1} parent=1 // pred_fallthru
      _
    // Predicated region
    $region14: #{tpu_custom_call.1} parent=1 // pred_check
      _
    $region15: #{tpu_custom_call.1} parent=1 // pred_check_branch
      %25 = sbr.rel (0) target = $region17
    $region16: #{tpu_custom_call.1} parent=1 // pred_region
      %26 = dma.done [#allocation3], 128
    $region17: #{tpu_custom_call.1} parent=1 // pred_fallthru
      _
    %v27 = vld [vmem:[#allocation2] sm:$0xff]
    %v28 = vrot.slane %v27, 4
    %v29 = vadd.f32 %v27, %v28
    %v30 = vrot.slane %v29, 2
    %v31 = vadd.f32 %v29, %v30
    %v32 = vrot.slane %v31, 1
    %v33 = vadd.f32 %v31, %v32
    %v34 = vmul.f32 %v27, %v27
    %v35 = vrot.slane %v34, 4
    %v36 = vadd.f32 %v34, %v35
    %v37 = vrot.slane %v36, 2
    %v38 = vadd.f32 %v36, %v37
    %v39 = vrot.slane %v38, 1
    %v40 = vadd.f32 %v38, %v39
    %v41 = vmul.f32 %v33, 0.25
    %v42 = vmul.f32 %v40, 0.25
    %v43 = vmul.f32 %v41, %v41
    %v44 = vsub.f32 %v42, %v43
    %v45 = vmax.f32 %v44, 0.0
    %v46 = vadd.f32 %v45, 1e-05
    %v47 = vrsqrt.pop %v46
    %v48 = vld [vmem:[%s1] sm:$0x1]
    %v49 = vmul.f32 %v47, %v48
    %v50 = vld [vmem:[%s2] sm:$0x1]
    %v51 = vmul.f32 %v41, %v49
    %v52 = vsub.f32 %v50, %v51
    %v53 = vlaneseq
    %v54 = vshrl.u32 %v53, 7
    %v55 = vsub.s32 0, %v54
    %v56 = vrot.slane %v49, %v55
    %v57 = vmul.f32 %v27, %v56
    %v59 = vlaneseq
    %v60 = vshrl.u32 %v59, 7
    %v61 = vsub.s32 0, %v60
    %v62 = vrot.slane %v52, %v61
    %v64 = vadd.f32 %v57, %v62
    %65 = vst [vmem:[#allocation5] sm:$0xff] %v64
    // Predicated region
    $region18: #{tpu_custom_call.1} parent=1 // pred_check
      _
    $region19: #{tpu_custom_call.1} parent=1 // pred_check_branch
      %67 = sbr.rel (0) target = $region21
    $region20: #{tpu_custom_call.1} parent=1 // pred_region
      %s69 = ssub.s32 128, 128
      %70 = vsyncadd [#allocation4], %s69
      %s72 = sshll.u32 [#allocation5], 4
      %s73 = int_to_ptr.vmem [resolvable:$true] %s72
      %75 = dma.vmem_to_hbm [thread:$0]  %s73, 128, %s3, [#allocation4]
    $region21: #{tpu_custom_call.1} parent=1 // pred_fallthru
      _
    // Predicated region
    $region22: #{tpu_custom_call.1} parent=1 // pred_check
      _
    $region23: #{tpu_custom_call.1} parent=1 // pred_check_branch
      %77 = sbr.rel (0) target = $region25
    $region24: #{tpu_custom_call.1} parent=1 // pred_region
      %78 = dma.done [#allocation4], 128
    $region25: #{tpu_custom_call.1} parent=1 // pred_fallthru
      _
    %79 = vsyncpa [#allocation3], 1
    %80 = vsyncpa [#allocation4], 1

</llo_original>
